<compile_context>
chip_gen: v6e
topology: v6e:2x2x1
jax: 0.10.0
libtpu: 0.0.40
codegen_flags: <defaults>
</compile_context>

<pallas_src>
import math
import functools

import jax
import jax.numpy as jnp
from jax import lax
from jax.experimental import pallas as pl
from jax.experimental.pallas import tpu as pltpu

CP = 128  # lane-dense packed output width (multiple of 128)


# ---------------------------------------------------------------------------
# Kernel: one im2col concat + one MXU matmul per batch item
# ---------------------------------------------------------------------------

def _make_octconv_kernel(k, Wlp, Mo):
    """hfp_ref: (4, Mp, Ch) bf16 flattened padded hf parity planes (plane q=(a,b): xpad[a::2,b::2])
       lfp_ref: (Mp, Cl+Ch) bf16 flattened padded [lf | avg_pool(hf)] plane
       w_ref  : (Ktot, CP) bf16 packed weights, b_ref: (1, CP) f32 packed bias
       o_ref  : (Mo, CP) f32; cols [p*ch_out:(p+1)*ch_out] = hf parity p, cols [4*ch_out:+cl_out] = lf out."""

    def kernel(hfp_ref, lfp_ref, w_ref, b_ref, o_ref):
        pieces = []
        # H2H taps, one parity p=(dy,dx) of the 2x-upsampled hf output at a time.
        # Each tap is a contiguous row-slice of a parity plane (no strided reads).
        for p in range(4):
            dy, dx = divmod(p, 2)
            for ky in range(k):
                for kx in range(k):
                    q = ((dy + ky) % 2) * 2 + ((dx + kx) % 2)
                    off = ((dy + ky) // 2) * Wlp + ((dx + kx) // 2)
                    pieces.append(hfp_ref[q, pl.ds(off, Mo), :])     # (Mo, Ch) bf16
        # L2H / L2L / H2L taps: lf and pooled channels are pre-concatenated, one slice per tap.
        for ky in range(k):
            for kx in range(k):
                pieces.append(lfp_ref[pl.ds(ky * Wlp + kx, Mo), :])  # (Mo, Cl+Ch) bf16

        slab = jnp.concatenate(pieces, axis=-1)                      # (Mo, Ktot) bf16 im2col
        acc = jnp.dot(slab, w_ref[...], preferred_element_type=jnp.float32)  # (Mo, CP) f32
        o_ref[...] = acc + b_ref[...]

    return kernel


# ---------------------------------------------------------------------------
# Wrapper-side packing (weights / bias) and layout prep
# ---------------------------------------------------------------------------

def _pack_weights_bias(params, k, Ch, Cl, ch_out, cl_out):
    """Pack all four convs into one (Ktot, CP) bf16 matrix + (1, CP) f32 bias.

    Row order matches the im2col piece order in the kernel.  Output column layout:
      cols [p*ch_out:(p+1)*ch_out], p=0..3 : h2h parity p  (+ l2h, + h2h_b + l2h_b)
      cols [4*ch_out : 4*ch_out+cl_out]    : l2l + h2l     (+ l2l_b + h2l_b)
    """
    Ktot = 4 * k * k * Ch + k * k * (Cl + Ch)
    W = jnp.zeros((Ktot, CP), jnp.float32)
    h2h = jnp.transpose(params["h2h_w"], (2, 3, 1, 0))   # (k,k,Ch,ch_out)
    l2h = jnp.transpose(params["l2h_w"], (2, 3, 1, 0))   # (k,k,Cl,ch_out)
    l2l = jnp.transpose(params["l2l_w"], (2, 3, 1, 0))   # (k,k,Cl,cl_out)
    h2l = jnp.transpose(params["h2l_w"], (2, 3, 1, 0))   # (k,k,Ch,cl_out)

    r = 0
    for p in range(4):                                   # hf parity column blocks
        for ky in range(k):
            for kx in range(k):
                W = W.at[r:r + Ch, p * ch_out:(p + 1) * ch_out].set(h2h[ky, kx])
                r += Ch
    for ky in range(k):                                  # lf + pooled channel rows
        for kx in range(k):
            for q in range(4):                           # l2h replicated -> fused 2x upsample
                W = W.at[r:r + Cl, q * ch_out:(q + 1) * ch_out].set(l2h[ky, kx])
            W = W.at[r:r + Cl, 4 * ch_out:4 * ch_out + cl_out].set(l2l[ky, kx])
            r += Cl
            W = W.at[r:r + Ch, 4 * ch_out:4 * ch_out + cl_out].set(h2l[ky, kx])
            r += Ch
    assert r == Ktot

    b = jnp.zeros((1, CP), jnp.float32)
    hb = params["h2h_b"] + params["l2h_b"]
    for p in range(4):
        b = b.at[0, p * ch_out:(p + 1) * ch_out].set(hb)
    b = b.at[0, 4 * ch_out:4 * ch_out + cl_out].set(params["l2l_b"] + params["h2l_b"])
    return W.astype(jnp.bfloat16), b


def octconv_forward(hf_nchw, lf_nchw, params, k):
    """Mirrors OctConv.forward for alpha_in = alpha_out = 0.5 (all four branches), stride=1."""
    hf = jnp.transpose(hf_nchw, (0, 2, 3, 1))  # NCHW -> NHWC
    lf = jnp.transpose(lf_nchw, (0, 2, 3, 1))
    B, H, W_, Ch = hf.shape
    _, Hl, Wl, Cl = lf.shape
    pad = k // 2
    Hlo, Wlo = Hl + 2 * pad - k + 1, Wl + 2 * pad - k + 1   # lf-branch output spatial
    Ho, Wo = H + 2 * pad - k + 1, W_ + 2 * pad - k + 1      # hf-branch output spatial
    Hp, Wp = H // k, W_ // k                                # pooled spatial

    ch_out = params["h2h_w"].shape[0]
    cl_out = params["l2l_w"].shape[0]
    assert 4 * ch_out + cl_out <= CP
    # geometry under which the reference module's branch additions are shape-valid
    assert Hp + 2 * pad - k + 1 == Hlo and Wp + 2 * pad - k + 1 == Wlo
    assert Ho == 2 * Hlo and Wo == 2 * Wlo
    assert Hp == Hl and Wp == Wl

    Hlp, Wlp = Hlo + k - 1, Wlo + k - 1     # padded lf/pooled plane spatial
    Hpl = Hlp + 1                           # +1 guard row: flattened taps never run off the end
    Mp = Hpl * Wlp                          # flattened input plane rows
    Mo = Hlo * Wlp                          # output rows (cols >= Wlo per row are junk, sliced off)
    Ktot = 4 * k * k * Ch + k * k * (Cl + Ch)

    # ---- layout prep (cheap XLA pads/reshapes on tiny tensors; no conv math) ----
    # hf parity planes of the zero-padded hf: plane (a,b)[r,c] = hf_pad[2r+a, 2c+b]
    pad_b, pad_r = 2 * Hpl - H - pad, 2 * Wlp - W_ - pad
    assert pad_b >= pad and pad_r >= pad
    xpe = jnp.pad(hf, [(0, 0), (pad, pad_b), (pad, pad_r), (0, 0)])
    hfp = (xpe.reshape(B, Hpl, 2, Wlp, 2, Ch)
              .transpose(0, 2, 4, 1, 3, 5)
              .reshape(B, 4, Mp, Ch)
              .astype(jnp.bfloat16))
    # avg_pool(hf, k, k) concatenated with lf, zero-padded, flattened
    pooled = hf[:, :Hp * k, :Wp * k, :].reshape(B, Hp, k, Wp, k, Ch).mean(axis=(2, 4))
    lfpool = jnp.concatenate([lf, pooled], axis=-1)                    # (B, Hl, Wl, Cl+Ch)
    lfp = (jnp.pad(lfpool, [(0, 0), (pad, pad + 1), (pad, pad), (0, 0)])
              .reshape(B, Mp, Cl + Ch)
              .astype(jnp.bfloat16))

    w_big, b_big = _pack_weights_bias(params, k, Ch, Cl, ch_out, cl_out)

    out = pl.pallas_call(
        _make_octconv_kernel(k, Wlp, Mo),
        out_shape=jax.ShapeDtypeStruct((B, Mo, CP), jnp.float32),
        grid_spec=pltpu.PrefetchScalarGridSpec(
            num_scalar_prefetch=0, grid=(B,),
            in_specs=[
                pl.BlockSpec((None, 4, Mp, Ch), lambda b: (b, 0, 0, 0)),
                pl.BlockSpec((None, Mp, Cl + Ch), lambda b: (b, 0, 0)),
                pl.BlockSpec((Ktot, CP), lambda b: (0, 0)),   # weights resident across grid
                pl.BlockSpec((1, CP), lambda b: (0, 0)),      # bias resident across grid
            ],
            out_specs=pl.BlockSpec((None, Mo, CP), lambda b: (b, 0, 0)),
        ),
        compiler_params=pltpu.CompilerParams(
            dimension_semantics=("parallel",),        # batch steps -> megacore / 2-TC split
            vmem_limit_bytes=32 * 1024 * 1024,        # tiny blocks; raise on v5e/v6e if tiles grow
        ),
    )(hfp, lfp, w_big, b_big)

    # ---- unpack: drop junk columns, split column blocks, undo parity layout, back to NCHW ----
    o4 = out.reshape(B, Hlo, Wlp, CP)[:, :, :Wlo, :]
    lf_out = jnp.transpose(o4[..., 4 * ch_out:4 * ch_out + cl_out], (0, 3, 1, 2))
    hp = o4[..., :4 * ch_out].reshape(B, Hlo, Wlo, 2, 2, ch_out)       # (..., dy, dx, c)
    hf_out = jnp.transpose(hp, (0, 1, 3, 2, 4, 5)).reshape(B, Ho, Wo, ch_out)
    hf_out = jnp.transpose(hf_out, (0, 3, 1, 2))
    return hf_out, lf_out


# ---------------------------------------------------------------------------
# Pure-JAX reference (sanity check only)
# ---------------------------------------------------------------------------

def _upsample_nearest_2x(x_nhwc):
    return jnp.repeat(jnp.repeat(x_nhwc, 2, axis=1), 2, axis=2)


def _conv_ref(x_nhwc, w_oihw, bias, k):
    pad = k // 2
    w_hwio = jnp.transpose(w_oihw, (2, 3, 1, 0))
    y = lax.conv_general_dilated(
        x_nhwc, w_hwio, window_strides=(1, 1),
        padding=[(pad, pad), (pad, pad)],
        dimension_numbers=("NHWC", "HWIO", "NHWC"))
    return y + bias.reshape(1, 1, 1, -1)


def octconv_ref(hf_nchw, lf_nchw, params, k):
    hf = jnp.transpose(hf_nchw, (0, 2, 3, 1))
    lf = jnp.transpose(lf_nchw, (0, 2, 3, 1))
    h2h = _conv_ref(hf, params["h2h_w"], params["h2h_b"], k)
    l2l = _conv_ref(lf, params["l2l_w"], params["l2l_b"], k)
    B, H, W, C = hf.shape
    Hp, Wp = H // k, W // k
    pooled = hf[:, :Hp * k, :Wp * k, :].reshape(B, Hp, k, Wp, k, C).mean(axis=(2, 4))
    h2l = _conv_ref(pooled, params["h2l_w"], params["h2l_b"], k)
    l2h = _upsample_nearest_2x(_conv_ref(lf, params["l2h_w"], params["l2h_b"], k))
    hf_out = h2h + l2h
    lf_out = l2l + h2l
    return jnp.transpose(hf_out, (0, 3, 1, 2)), jnp.transpose(lf_out, (0, 3, 1, 2))


# ---------------------------------------------------------------------------
# Parameter init (mimics PyTorch Conv2d default uniform bounds)
# ---------------------------------------------------------------------------

def init_conv(key, cin, cout, k):
    kw, kb = jax.random.split(key)
    bound = 1.0 / math.sqrt(cin * k * k)
    w = jax.random.uniform(kw, (cout, cin, k, k), jnp.float32, -bound, bound)
    b = jax.random.uniform(kb, (cout,), jnp.float32, -bound, bound)
    return w, b


if __name__ == "__main__":
    key = jax.random.PRNGKey(0)
    k_hf, k_lf, k1, k2, k3, k4 = jax.random.split(key, 6)

    # OctConv(in_channels=8, out_channels=8, kernel_size=2, stride=1, alpha=0.5/0.5)
    in_channels, out_channels, ksize = 8, 8, 2
    alpha_in = alpha_out = 0.5
    cl_in = int(alpha_in * in_channels)
    ch_in = in_channels - cl_in
    cl_out = int(alpha_out * out_channels)
    ch_out = out_channels - cl_out

    B = 2
    H = W = 17          # high-frequency spatial
    Hl = Wl = 8         # low-frequency spatial (H = 2*Hl + 1 -> all branch adds are valid)

    hf = jax.random.normal(k_hf, (B, ch_in, H, W), jnp.float32)
    lf = jax.random.normal(k_lf, (B, cl_in, Hl, Wl), jnp.float32)

    params = {}
    params["l2l_w"], params["l2l_b"] = init_conv(k1, cl_in, cl_out, ksize)
    params["l2h_w"], params["l2h_b"] = init_conv(k2, cl_in, ch_out, ksize)
    params["h2l_w"], params["h2l_b"] = init_conv(k3, ch_in, cl_out, ksize)
    params["h2h_w"], params["h2h_b"] = init_conv(k4, ch_in, ch_out, ksize)

    fwd = jax.jit(functools.partial(octconv_forward, k=ksize))
    hf_out, lf_out = fwd(hf, lf, params)
    jax.block_until_ready((hf_out, lf_out))

    # sanity check against a pure-JAX reference (bf16 MXU operands -> loose tolerance)
    hf_ref, lf_ref = octconv_ref(hf, lf, params, ksize)
    assert hf_out.shape == hf_ref.shape == (B, ch_out, H + 1, W + 1)
    assert lf_out.shape == lf_ref.shape == (B, cl_out, Hl + 1, Wl + 1)
    assert jnp.allclose(hf_out, hf_ref, atol=1e-1, rtol=5e-2)
    assert jnp.allclose(lf_out, lf_ref, atol=1e-1, rtol=5e-2)

    print("KERNEL_OK")
</pallas_src>

<mosaic_0001>
module attributes {stable_mosaic.version = 11 : i64} {
  func.func @kernel(%arg0: i32, %arg1: memref<1x4x110x4xbf16, #tpu.memory_space<vmem>>, %arg2: memref<1x110x8xbf16, #tpu.memory_space<vmem>>, %arg3: memref<96x128xbf16, #tpu.memory_space<vmem>>, %arg4: memref<1x128xf32, #tpu.memory_space<vmem>>, %arg5: memref<1x90x128xf32, #tpu.memory_space<vmem>>) attributes {dimension_semantics = [#tpu.dimension_semantics<parallel>], iteration_bounds = array<i64: 2>, scalar_prefetch = 0 : i64, scratch_operands = 0 : i64, tpu.core_type = #tpu.core_type<tc>, window_params = [{transform_indices = @transform_0, window_bounds = array<i64: 1, 4, 110, 4>}, {transform_indices = @transform_1, window_bounds = array<i64: 1, 110, 8>}, {pipeline_mode = #tpu.pipeline_mode<synchronous>, transform_indices = @transform_2, window_bounds = array<i64: 96, 128>}, {pipeline_mode = #tpu.pipeline_mode<synchronous>, transform_indices = @transform_3, window_bounds = array<i64: 1, 128>}, {transform_indices = @transform_4, window_bounds = array<i64: 1, 90, 128>}]} {
    %c0 = arith.constant 0 : index
    %c0_0 = arith.constant 0 : index
    %c0_1 = arith.constant 0 : index
    %c0_2 = arith.constant 0 : index
    %0 = vector.load %arg1[%c0, %c0_0, %c0_1, %c0_2] : memref<1x4x110x4xbf16, #tpu.memory_space<vmem>>, vector<1x1x90x4xbf16>
    %1 = vector.shape_cast %0 : vector<1x1x90x4xbf16> to vector<90x4xbf16>
    %c0_3 = arith.constant 0 : index
    %c1 = arith.constant 1 : index
    %c0_4 = arith.constant 0 : index
    %c0_5 = arith.constant 0 : index
    %2 = vector.load %arg1[%c0_3, %c1, %c0_4, %c0_5] : memref<1x4x110x4xbf16, #tpu.memory_space<vmem>>, vector<1x1x90x4xbf16>
    %3 = vector.shape_cast %2 : vector<1x1x90x4xbf16> to vector<90x4xbf16>
    %c0_6 = arith.constant 0 : index
    %c2 = arith.constant 2 : index
    %c0_7 = arith.constant 0 : index
    %c0_8 = arith.constant 0 : index
    %4 = vector.load %arg1[%c0_6, %c2, %c0_7, %c0_8] : memref<1x4x110x4xbf16, #tpu.memory_space<vmem>>, vector<1x1x90x4xbf16>
    %5 = vector.shape_cast %4 : vector<1x1x90x4xbf16> to vector<90x4xbf16>
    %c0_9 = arith.constant 0 : index
    %c3 = arith.constant 3 : index
    %c0_10 = arith.constant 0 : index
    %c0_11 = arith.constant 0 : index
    %6 = vector.load %arg1[%c0_9, %c3, %c0_10, %c0_11] : memref<1x4x110x4xbf16, #tpu.memory_space<vmem>>, vector<1x1x90x4xbf16>
    %7 = vector.shape_cast %6 : vector<1x1x90x4xbf16> to vector<90x4xbf16>
    %c0_12 = arith.constant 0 : index
    %c1_13 = arith.constant 1 : index
    %c0_14 = arith.constant 0 : index
    %c0_15 = arith.constant 0 : index
    %8 = vector.load %arg1[%c0_12, %c1_13, %c0_14, %c0_15] : memref<1x4x110x4xbf16, #tpu.memory_space<vmem>>, vector<1x1x90x4xbf16>
    %9 = vector.shape_cast %8 : vector<1x1x90x4xbf16> to vector<90x4xbf16>
    %c0_16 = arith.constant 0 : index
    %c0_17 = arith.constant 0 : index
    %c1_18 = arith.constant 1 : index
    %c0_19 = arith.constant 0 : index
    %10 = vector.load %arg1[%c0_16, %c0_17, %c1_18, %c0_19] : memref<1x4x110x4xbf16, #tpu.memory_space<vmem>>, vector<1x1x90x4xbf16>
    %11 = vector.shape_cast %10 : vector<1x1x90x4xbf16> to vector<90x4xbf16>
    %c0_20 = arith.constant 0 : index
    %c3_21 = arith.constant 3 : index
    %c0_22 = arith.constant 0 : index
    %c0_23 = arith.constant 0 : index
    %12 = vector.load %arg1[%c0_20, %c3_21, %c0_22, %c0_23] : memref<1x4x110x4xbf16, #tpu.memory_space<vmem>>, vector<1x1x90x4xbf16>
    %13 = vector.shape_cast %12 : vector<1x1x90x4xbf16> to vector<90x4xbf16>
    %c0_24 = arith.constant 0 : index
    %c2_25 = arith.constant 2 : index
    %c1_26 = arith.constant 1 : index
    %c0_27 = arith.constant 0 : index
    %14 = vector.load %arg1[%c0_24, %c2_25, %c1_26, %c0_27] : memref<1x4x110x4xbf16, #tpu.memory_space<vmem>>, vector<1x1x90x4xbf16>
    %15 = vector.shape_cast %14 : vector<1x1x90x4xbf16> to vector<90x4xbf16>
    %c0_28 = arith.constant 0 : index
    %c2_29 = arith.constant 2 : index
    %c0_30 = arith.constant 0 : index
    %c0_31 = arith.constant 0 : index
    %16 = vector.load %arg1[%c0_28, %c2_29, %c0_30, %c0_31] : memref<1x4x110x4xbf16, #tpu.memory_space<vmem>>, vector<1x1x90x4xbf16>
    %17 = vector.shape_cast %16 : vector<1x1x90x4xbf16> to vector<90x4xbf16>
    %c0_32 = arith.constant 0 : index
    %c3_33 = arith.constant 3 : index
    %c0_34 = arith.constant 0 : index
    %c0_35 = arith.constant 0 : index
    %18 = vector.load %arg1[%c0_32, %c3_33, %c0_34, %c0_35] : memref<1x4x110x4xbf16, #tpu.memory_space<vmem>>, vector<1x1x90x4xbf16>
    %19 = vector.shape_cast %18 : vector<1x1x90x4xbf16> to vector<90x4xbf16>
    %c0_36 = arith.constant 0 : index
    %c0_37 = arith.constant 0 : index
    %c10 = arith.constant 10 : index
    %c0_38 = arith.constant 0 : index
    %20 = vector.load %arg1[%c0_36, %c0_37, %c10, %c0_38] : memref<1x4x110x4xbf16, #tpu.memory_space<vmem>>, vector<1x1x90x4xbf16>
    %21 = vector.shape_cast %20 : vector<1x1x90x4xbf16> to vector<90x4xbf16>
    %c0_39 = arith.constant 0 : index
    %c1_40 = arith.constant 1 : index
    %c10_41 = arith.constant 10 : index
    %c0_42 = arith.constant 0 : index
    %22 = vector.load %arg1[%c0_39, %c1_40, %c10_41, %c0_42] : memref<1x4x110x4xbf16, #tpu.memory_space<vmem>>, vector<1x1x90x4xbf16>
    %23 = vector.shape_cast %22 : vector<1x1x90x4xbf16> to vector<90x4xbf16>
    %c0_43 = arith.constant 0 : index
    %c3_44 = arith.constant 3 : index
    %c0_45 = arith.constant 0 : index
    %c0_46 = arith.constant 0 : index
    %24 = vector.load %arg1[%c0_43, %c3_44, %c0_45, %c0_46] : memref<1x4x110x4xbf16, #tpu.memory_space<vmem>>, vector<1x1x90x4xbf16>
    %25 = vector.shape_cast %24 : vector<1x1x90x4xbf16> to vector<90x4xbf16>
    %c0_47 = arith.constant 0 : index
    %c2_48 = arith.constant 2 : index
    %c1_49 = arith.constant 1 : index
    %c0_50 = arith.constant 0 : index
    %26 = vector.load %arg1[%c0_47, %c2_48, %c1_49, %c0_50] : memref<1x4x110x4xbf16, #tpu.memory_space<vmem>>, vector<1x1x90x4xbf16>
    %27 = vector.shape_cast %26 : vector<1x1x90x4xbf16> to vector<90x4xbf16>
    %c0_51 = arith.constant 0 : index
    %c1_52 = arith.constant 1 : index
    %c10_53 = arith.constant 10 : index
    %c0_54 = arith.constant 0 : index
    %28 = vector.load %arg1[%c0_51, %c1_52, %c10_53, %c0_54] : memref<1x4x110x4xbf16, #tpu.memory_space<vmem>>, vector<1x1x90x4xbf16>
    %29 = vector.shape_cast %28 : vector<1x1x90x4xbf16> to vector<90x4xbf16>
    %c0_55 = arith.constant 0 : index
    %c0_56 = arith.constant 0 : index
    %c11 = arith.constant 11 : index
    %c0_57 = arith.constant 0 : index
    %30 = vector.load %arg1[%c0_55, %c0_56, %c11, %c0_57] : memref<1x4x110x4xbf16, #tpu.memory_space<vmem>>, vector<1x1x90x4xbf16>
    %31 = vector.shape_cast %30 : vector<1x1x90x4xbf16> to vector<90x4xbf16>
    %c0_58 = arith.constant 0 : index
    %c0_59 = arith.constant 0 : index
    %c0_60 = arith.constant 0 : index
    %32 = vector.load %arg2[%c0_58, %c0_59, %c0_60] : memref<1x110x8xbf16, #tpu.memory_space<vmem>>, vector<1x90x8xbf16>
    %33 = vector.shape_cast %32 : vector<1x90x8xbf16> to vector<90x8xbf16>
    %c0_61 = arith.constant 0 : index
    %c1_62 = arith.constant 1 : index
    %c0_63 = arith.constant 0 : index
    %34 = vector.load %arg2[%c0_61, %c1_62, %c0_63] : memref<1x110x8xbf16, #tpu.memory_space<vmem>>, vector<1x90x8xbf16>
    %35 = vector.shape_cast %34 : vector<1x90x8xbf16> to vector<90x8xbf16>
    %c0_64 = arith.constant 0 : index
    %c10_65 = arith.constant 10 : index
    %c0_66 = arith.constant 0 : index
    %36 = vector.load %arg2[%c0_64, %c10_65, %c0_66] : memref<1x110x8xbf16, #tpu.memory_space<vmem>>, vector<1x90x8xbf16>
    %37 = vector.shape_cast %36 : vector<1x90x8xbf16> to vector<90x8xbf16>
    %c0_67 = arith.constant 0 : index
    %c11_68 = arith.constant 11 : index
    %c0_69 = arith.constant 0 : index
    %38 = vector.load %arg2[%c0_67, %c11_68, %c0_69] : memref<1x110x8xbf16, #tpu.memory_space<vmem>>, vector<1x90x8xbf16>
    %39 = vector.shape_cast %38 : vector<1x90x8xbf16> to vector<90x8xbf16>
    %40 = tpu.concatenate %1, %3, %5, %7, %9, %11, %13, %15, %17, %19, %21, %23, %25, %27, %29, %31 in 1 : vector<90x4xbf16>, vector<90x4xbf16>, vector<90x4xbf16>, vector<90x4xbf16>, vector<90x4xbf16>, vector<90x4xbf16>, vector<90x4xbf16>, vector<90x4xbf16>, vector<90x4xbf16>, vector<90x4xbf16>, vector<90x4xbf16>, vector<90x4xbf16>, vector<90x4xbf16>, vector<90x4xbf16>, vector<90x4xbf16>, vector<90x4xbf16> -> vector<90x64xbf16>
    %41 = tpu.concatenate %33, %35, %37, %39 in 1 : vector<90x8xbf16>, vector<90x8xbf16>, vector<90x8xbf16>, vector<90x8xbf16> -> vector<90x32xbf16>
    %42 = tpu.concatenate %40, %41 in 1 : vector<90x64xbf16>, vector<90x32xbf16> -> vector<90x96xbf16>
    %c0_70 = arith.constant 0 : index
    %c0_71 = arith.constant 0 : index
    %43 = vector.load %arg3[%c0_70, %c0_71] : memref<96x128xbf16, #tpu.memory_space<vmem>>, vector<96x128xbf16>
    %cst = arith.constant dense<0.000000e+00> : vector<90x128xf32>
    %44 = tpu.matmul %42, %43, %cst {dimension_numbers = #tpu.dot_dimension_numbers<[1], [0], [0], [1], [0, 0, 1, 1], [], []>} : vector<90x96xbf16>, vector<96x128xbf16>, vector<90x128xf32> -> vector<90x128xf32>
    %c0_72 = arith.constant 0 : index
    %c0_73 = arith.constant 0 : index
    %45 = vector.load %arg4[%c0_72, %c0_73] : memref<1x128xf32, #tpu.memory_space<vmem>>, vector<1x128xf32>
    %46 = vector.broadcast %45 : vector<1x128xf32> to vector<90x128xf32>
    %47 = arith.addf %44, %46 : vector<90x128xf32>
    %c0_74 = arith.constant 0 : index
    %c0_75 = arith.constant 0 : index
    %c0_76 = arith.constant 0 : index
    %48 = vector.load %arg5[%c0_74, %c0_75, %c0_76] : memref<1x90x128xf32, #tpu.memory_space<vmem>>, vector<1x90x128xf32>
    %49 = vector.shape_cast %48 : vector<1x90x128xf32> to vector<90x128xf32>
    %50 = vector.shape_cast %47 : vector<90x128xf32> to vector<1x90x128xf32>
    tpu.vector_store %arg5[%c0_74, %c0_75, %c0_76], %50 {strides = array<i32>} : memref<1x90x128xf32, #tpu.memory_space<vmem>>, vector<1x90x128xf32>,
    return
  }
  func.func @transform_0(%arg0: i32) -> (i32, i32, i32, i32) {
    %c0_i32 = arith.constant 0 : i32
    %c0_i32_0 = arith.constant 0 : i32
    %c0_i32_1 = arith.constant 0 : i32
    %c0_i32_2 = arith.constant 0 : i32
    return %arg0, %c0_i32, %c0_i32_0, %c0_i32_1 : i32, i32, i32, i32
  }
  func.func @transform_1(%arg0: i32) -> (i32, i32, i32) {
    %c0_i32 = arith.constant 0 : i32
    %c0_i32_0 = arith.constant 0 : i32
    %c0_i32_1 = arith.constant 0 : i32
    return %arg0, %c0_i32, %c0_i32_0 : i32, i32, i32
  }
  func.func @transform_2(%arg0: i32) -> (i32, i32) {
    %c0_i32 = arith.constant 0 : i32
    %c0_i32_0 = arith.constant 0 : i32
    %c0_i32_1 = arith.constant 0 : i32
    return %c0_i32, %c0_i32_0 : i32, i32
  }
  func.func @transform_3(%arg0: i32) -> (i32, i32) {
    %c0_i32 = arith.constant 0 : i32
    %c0_i32_0 = arith.constant 0 : i32
    %c0_i32_1 = arith.constant 0 : i32
    return %c0_i32, %c0_i32_0 : i32, i32
  }
  func.func @transform_4(%arg0: i32) -> (i32, i32, i32) {
    %c0_i32 = arith.constant 0 : i32
    %c0_i32_0 = arith.constant 0 : i32
    %c0_i32_1 = arith.constant 0 : i32
    return %arg0, %c0_i32, %c0_i32_0 : i32, i32, i32
  }
}

</mosaic_0001>

<llo_original>
// kernel: octconv_forward.1
$region0: #{octconv_forward.1}
  #allocation0 [shape = 'u32[]', space=smem, size = 0x4, offset = 0x4, fixed_abs, tag = 'smem constant byte address 0x4 - core index']
  #allocation1 [shape = 'u32[144,128]{1,0:T(1,128)}', space=vmem, size = 0x12000, scoped, tag = 'internal scratch']
  %s0 = inlined_call_operand.vmem [shape: bf16[2,4,110,4], index: 0, kind: input, shape index: {}]
  %s1 = inlined_call_operand.vmem [shape: bf16[2,110,8], index: 1, kind: input, shape index: {}]
  %s2 = inlined_call_operand.vmem [shape: bf16[96,128], index: 2, kind: input, shape index: {}]
  %s3 = inlined_call_operand.vmem [shape: f32[1,128], index: 3, kind: input, shape index: {}]
  %s4 = inlined_call_operand.vmem [shape: f32[2,90,128], index: 4, kind: output, shape index: {}]
  %s5 = sld [smem:[#allocation0]]
  $region49: #{octconv_forward.1} parent=0
    _
  %s7 = ssub.s32 1, %s5
  %s8 = scalar_select 0, %s7, %s5
  loop: start=0, step=1, limit=4
  $region2: #{octconv_forward.1} parent=0 // loop_pre_header
    _
  $region3: #{octconv_forward.1} parent=0 // loop_header
    %s10 = sphi 0, %s14
    %p11 = scmp.ge.s32.totalorder %s10, 4
    %s20 = sphi 0, %s22
    %s23 = sphi 0, %s20
    %s24 = sphi 0, %s23
    %s40 = sphi 0, %s24
    %s46 = sphi 0, %s48
    %s49 = sphi 0, %s46
    %s50 = sphi 0, %s49
    %s66 = sphi 0, %s50
    %s70 = sphi 0, %s70
    %s72 = sphi 0, %s70
    %s73 = sphi 0, %s72
    %s87 = sphi 0, %s73
    %s91 = sphi 0, %s91
    %s93 = sphi 0, %s91
    %s94 = sphi 0, %s93
    %s108 = sphi 0, %s94
    %s114 = sphi 0, %s116
    %s117 = sphi 0, %s114
    %s118 = sphi 0, %s117
    %s134 = sphi 0, %s118
  $region4: #{octconv_forward.1} parent=0 // loop_header_branch
    %13 = sbr.rel (%p11) target = $region8
  $region5: #{octconv_forward.1} parent=0 // loop_body
    %s15 = ssub.s32 %s10, 1
    %s16 = ssub.s32 %s10, 2
    %s17 = sadd.s32 %s10, 1
    %s18 = ssub.s32 %s10, %s17
    %p19 = scmp.eq.s32.totalorder %s18, 0
    %s21 = sadd.s32 %s20, 1
    %s22 = scalar_select %p19, %s20, %s21
    %p25 = pneg %p19
    %p26 = scmp.eq.s32.totalorder %s10, 1
    %p27 = por %p25, %p26
    %p28 = scmp.ne.s32.totalorder %s20, %s23
    %p29 = scmp.eq.s32.totalorder %s10, 0
    %p30 = por %p28, %p29
    %p31 = scmp.ne.s32.totalorder %s20, %s23
    %p32 = scmp.eq.s32.totalorder %s15, 1
    %p33 = por %p31, %p32
    %p34 = scmp.ne.s32.totalorder %s23, %s24
    %p35 = scmp.eq.s32.totalorder %s15, 0
    %p36 = por %p34, %p35
    %p37 = scmp.ne.s32.totalorder %s23, %s24
    %p38 = scmp.eq.s32.totalorder %s16, 1
    %p39 = por %p37, %p38
    %p41 = scmp.ne.s32.totalorder %s24, %s40
    %p42 = scmp.eq.s32.totalorder %s16, 0
    %p43 = por %p41, %p42
    %s44 = ssub.s32 %s10, %s17
    %p45 = scmp.eq.s32.totalorder %s44, 0
    %s47 = sadd.s32 %s46, 1
    %s48 = scalar_select %p45, %s46, %s47
    %p51 = pneg %p45
    %p52 = scmp.eq.s32.totalorder %s10, 1
    %p53 = por %p51, %p52
    %p54 = scmp.ne.s32.totalorder %s46, %s49
    %p55 = scmp.eq.s32.totalorder %s10, 0
    %p56 = por %p54, %p55
    %p57 = scmp.ne.s32.totalorder %s46, %s49
    %p58 = scmp.eq.s32.totalorder %s15, 1
    %p59 = por %p57, %p58
    %p60 = scmp.ne.s32.totalorder %s49, %s50
    %p61 = scmp.eq.s32.totalorder %s15, 0
    %p62 = por %p60, %p61
    %p63 = scmp.ne.s32.totalorder %s49, %s50
    %p64 = scmp.eq.s32.totalorder %s16, 1
    %p65 = por %p63, %p64
    %p67 = scmp.ne.s32.totalorder %s50, %s66
    %p68 = scmp.eq.s32.totalorder %s16, 0
    %p69 = por %p67, %p68
    %s71 = sadd.s32 %s70, 1
    %p74 = scmp.eq.s32.totalorder %s10, 1
    %p75 = scmp.ne.s32.totalorder %s70, %s72
    %p76 = scmp.eq.s32.totalorder %s10, 0
    %p77 = por %p75, %p76
    %p78 = scmp.ne.s32.totalorder %s70, %s72
    %p79 = scmp.eq.s32.totalorder %s15, 1
    %p80 = por %p78, %p79
    %p81 = scmp.ne.s32.totalorder %s72, %s73
    %p82 = scmp.eq.s32.totalorder %s15, 0
    %p83 = por %p81, %p82
    %p84 = scmp.ne.s32.totalorder %s72, %s73
    %p85 = scmp.eq.s32.totalorder %s16, 1
    %p86 = por %p84, %p85
    %p88 = scmp.ne.s32.totalorder %s73, %s87
    %p89 = scmp.eq.s32.totalorder %s16, 0
    %p90 = por %p88, %p89
    %s92 = sadd.s32 %s91, 1
    %p95 = scmp.eq.s32.totalorder %s10, 1
    %p96 = scmp.ne.s32.totalorder %s91, %s93
    %p97 = scmp.eq.s32.totalorder %s10, 0
    %p98 = por %p96, %p97
    %p99 = scmp.ne.s32.totalorder %s91, %s93
    %p100 = scmp.eq.s32.totalorder %s15, 1
    %p101 = por %p99, %p100
    %p102 = scmp.ne.s32.totalorder %s93, %s94
    %p103 = scmp.eq.s32.totalorder %s15, 0
    %p104 = por %p102, %p103
    %p105 = scmp.ne.s32.totalorder %s93, %s94
    %p106 = scmp.eq.s32.totalorder %s16, 1
    %p107 = por %p105, %p106
    %p109 = scmp.ne.s32.totalorder %s94, %s108
    %p110 = scmp.eq.s32.totalorder %s16, 0
    %p111 = por %p109, %p110
    %s112 = ssub.s32 %s10, %s17
    %p113 = scmp.eq.s32.totalorder %s112, 0
    %s115 = sadd.s32 %s114, 1
    %s116 = scalar_select %p113, %s114, %s115
    %p119 = pneg %p113
    %p120 = scmp.eq.s32.totalorder %s10, 1
    %p121 = por %p119, %p120
    %p122 = scmp.ne.s32.totalorder %s114, %s117
    %p123 = scmp.eq.s32.totalorder %s10, 0
    %p124 = por %p122, %p123
    %p125 = scmp.ne.s32.totalorder %s114, %s117
    %p126 = scmp.eq.s32.totalorder %s15, 1
    %p127 = por %p125, %p126
    %p128 = scmp.ne.s32.totalorder %s117, %s118
    %p129 = scmp.eq.s32.totalorder %s15, 0
    %p130 = por %p128, %p129
    %p131 = scmp.ne.s32.totalorder %s117, %s118
    %p132 = scmp.eq.s32.totalorder %s16, 1
    %p133 = por %p131, %p132
    %p135 = scmp.ne.s32.totalorder %s118, %s134
    %p136 = scmp.eq.s32.totalorder %s16, 0
    %p137 = por %p135, %p136
    %p138 = scmp.le.s32.totalorder 1, %s10
    %p139 = scmp.lt.s32.totalorder %s10, 3
    %p140 = pnand %p138, %p139
    %p141 = pneg %p140
    // Predicated region
    $region9: #{octconv_forward.1} parent=5 // pred_check
      _
    $region10: #{octconv_forward.1} parent=5 // pred_check_branch
      %143 = sbr.rel (%p140) target = $region12
    $region11: #{octconv_forward.1} parent=5 // pred_region
      %s144 = ssub.s32 %s10, 1
      // Predicated region
      $region13: #{octconv_forward.1} parent=11 // pred_check
        %p145 = pneg %p83
      $region14: #{octconv_forward.1} parent=11 // pred_check_branch
        %147 = sbr.rel (%p145) target = $region16
      $region15: #{octconv_forward.1} parent=11 // pred_region
        _
      $region16: #{octconv_forward.1} parent=11 // pred_fallthru
        _
      // Predicated region
      $region17: #{octconv_forward.1} parent=11 // pred_check
        %p148 = pneg %p104
      $region18: #{octconv_forward.1} parent=11 // pred_check_branch
        %150 = sbr.rel (%p148) target = $region20
      $region19: #{octconv_forward.1} parent=11 // pred_region
        _
      $region20: #{octconv_forward.1} parent=11 // pred_fallthru
        _
    $region12: #{octconv_forward.1} parent=5 // pred_fallthru
      _
    %p151 = scmp.lt.s32.totalorder %s10, 2
    // Predicated region
    $region21: #{octconv_forward.1} parent=5 // pred_check
      %p152 = pneg %p151
    $region22: #{octconv_forward.1} parent=5 // pred_check_branch
      %154 = sbr.rel (%p152) target = $region24
    $region23: #{octconv_forward.1} parent=5 // pred_region
      // Predicated region
      $region25: #{octconv_forward.1} parent=23 // pred_check
        %p155 = pneg %p30
      $region26: #{octconv_forward.1} parent=23 // pred_check_branch
        %157 = sbr.rel (%p155) target = $region28
      $region27: #{octconv_forward.1} parent=23 // pred_region
        %p158 = scmp.lt.s32.totalorder %s10, 1
        %s159 = scalar_select %p158, %s10, 1
        %s160 = smul.addr %s159, 56
        %s161 = smul.addr %s160, 4
        %s162 = scalar_lea.vmem %s0, %s161
      $region28: #{octconv_forward.1} parent=23 // pred_fallthru
        _
      // Predicated region
      $region29: #{octconv_forward.1} parent=23 // pred_check
        %p163 = pneg %p56
      $region30: #{octconv_forward.1} parent=23 // pred_check_branch
        %165 = sbr.rel (%p163) target = $region32
      $region31: #{octconv_forward.1} parent=23 // pred_region
        %p166 = scmp.lt.s32.totalorder %s10, 1
        %s167 = scalar_select %p166, %s10, 1
        %s168 = smul.addr %s167, 14
        %s169 = smul.addr %s168, 4
        %s170 = scalar_lea.vmem %s1, %s169
      $region32: #{octconv_forward.1} parent=23 // pred_fallthru
        _
    $region24: #{octconv_forward.1} parent=5 // pred_fallthru
      _
    %p171 = scmp.le.s32.totalorder 1, %s10
    %p172 = scmp.lt.s32.totalorder %s10, 3
    %p173 = pnand %p171, %p172
    %p174 = pneg %p173
    // Predicated region
    $region33: #{octconv_forward.1} parent=5 // pred_check
      _
    $region34: #{octconv_forward.1} parent=5 // pred_check_branch
      %176 = sbr.rel (%p173) target = $region36
    $region35: #{octconv_forward.1} parent=5 // pred_region
      %s177 = ssub.s32 %s10, 1
      %p178 = scmp.lt.s32.totalorder %s15, 1
      %s179 = scalar_select %p178, %s15, 1
      %s180 = smul.addr %s179, 56
      %s181 = smul.addr %s180, 4
      %s182 = scalar_lea.vmem %s0, %s181
      %p183 = pneg %p36
      %p184 = pneg %p33
      %p185 = scmp.lt.s32.totalorder %s15, 1
      %s186 = scalar_select %p185, %s15, 1
      %s187 = smul.addr %s186, 14
      %s188 = smul.addr %s187, 4
      %s189 = scalar_lea.vmem %s1, %s188
      %p190 = pneg %p62
      %p191 = pneg %p59
      %p192 = pneg %p83
      %p193 = pneg %p80
      %p194 = pneg %p104
      %p195 = pneg %p101
      %p196 = pneg %p130
      %p197 = pneg %p127
      %p198 = scmp.lt.s32.totalorder %s15, 1
      %s199 = scalar_select %p198, %s15, 1
      %s200 = smul.addr %s199, 12
      %s201 = smul.addr %s200, 8
      %s202 = scalar_lea.vmem %s4, %s201
      %p203 = scmp.lt.s32.totalorder %s15, 1
      %s204 = scalar_select %p203, %s15, 1
      %s205 = smul.addr %s204, 56
      %s206 = smul.addr %s205, 4
      %s207 = scalar_lea.vmem %s0, %s206
      %p208 = scmp.lt.s32.totalorder %s15, 1
      %s209 = scalar_select %p208, %s15, 1
      %s210 = smul.addr %s209, 14
      %s211 = smul.addr %s210, 4
      %s212 = scalar_lea.vmem %s1, %s211
      %p213 = scmp.lt.s32.totalorder %s15, 1
      %s214 = scalar_select %p213, %s15, 1
      %s215 = smul.addr %s214, 12
      %s216 = smul.addr %s215, 8
      %s217 = scalar_lea.vmem %s4, %s216
      %v219 = vld [vmem:[%s207] sm:$0xf]
      %v220 = vld [vmem:[%s207 + $0x4] sm:$0xf]
      %v221 = vld [vmem:[%s207 + $0x8] sm:$0xf]
      %v222 = vld [vmem:[%s207 + $0xc] sm:$0xf]
      %v223 = vld [vmem:[%s207 + $0x10] sm:$0xf]
      %v224 = vld [vmem:[%s207 + $0x14] sm:$0xf]
      %v225 = vld [vmem:[%s207 + $0x18] sm:$0xf]
      %v226 = vld [vmem:[%s207 + $0x1c] sm:$0xf]
      %v227 = vld [vmem:[%s207 + $0x20] sm:$0xf]
      %v228 = vld [vmem:[%s207 + $0x24] sm:$0xf]
      %v229 = vld [vmem:[%s207 + $0x28] sm:$0xf]
      %v230 = vld [vmem:[%s207 + $0x2c] sm:$0x1]
      %s231 = scalar_lea.vmem %s207, 56
      %v232 = vld [vmem:[%s231] sm:$0xf]
      %v233 = vld [vmem:[%s231 + $0x4] sm:$0xf]
      %v234 = vld [vmem:[%s231 + $0x8] sm:$0xf]
      %v235 = vld [vmem:[%s231 + $0xc] sm:$0xf]
      %v236 = vld [vmem:[%s231 + $0x10] sm:$0xf]
      %v237 = vld [vmem:[%s231 + $0x14] sm:$0xf]
      %v238 = vld [vmem:[%s231 + $0x18] sm:$0xf]
      %v239 = vld [vmem:[%s231 + $0x1c] sm:$0xf]
      %v240 = vld [vmem:[%s231 + $0x20] sm:$0xf]
      %v241 = vld [vmem:[%s231 + $0x24] sm:$0xf]
      %v242 = vld [vmem:[%s231 + $0x28] sm:$0xf]
      %v243 = vld [vmem:[%s231 + $0x2c] sm:$0x1]
      %s244 = scalar_lea.vmem %s207, 112
      %v245 = vld [vmem:[%s244] sm:$0xf]
      %v246 = vld [vmem:[%s244 + $0x4] sm:$0xf]
      %v247 = vld [vmem:[%s244 + $0x8] sm:$0xf]
      %v248 = vld [vmem:[%s244 + $0xc] sm:$0xf]
      %v249 = vld [vmem:[%s244 + $0x10] sm:$0xf]
      %v250 = vld [vmem:[%s244 + $0x14] sm:$0xf]
      %v251 = vld [vmem:[%s244 + $0x18] sm:$0xf]
      %v252 = vld [vmem:[%s244 + $0x1c] sm:$0xf]
      %v253 = vld [vmem:[%s244 + $0x20] sm:$0xf]
      %v254 = vld [vmem:[%s244 + $0x24] sm:$0xf]
      %v255 = vld [vmem:[%s244 + $0x28] sm:$0xf]
      %v256 = vld [vmem:[%s244 + $0x2c] sm:$0x1]
      %s257 = scalar_lea.vmem %s207, 168
      %v258 = vld [vmem:[%s257] sm:$0xf]
      %v259 = vld [vmem:[%s257 + $0x4] sm:$0xf]
      %v260 = vld [vmem:[%s257 + $0x8] sm:$0xf]
      %v261 = vld [vmem:[%s257 + $0xc] sm:$0xf]
      %v262 = vld [vmem:[%s257 + $0x10] sm:$0xf]
      %v263 = vld [vmem:[%s257 + $0x14] sm:$0xf]
      %v264 = vld [vmem:[%s257 + $0x18] sm:$0xf]
      %v265 = vld [vmem:[%s257 + $0x1c] sm:$0xf]
      %v266 = vld [vmem:[%s257 + $0x20] sm:$0xf]
      %v267 = vld [vmem:[%s257 + $0x24] sm:$0xf]
      %v268 = vld [vmem:[%s257 + $0x28] sm:$0xf]
      %v269 = vld [vmem:[%s257 + $0x2c] sm:$0x1]
      %v270 = vld [vmem:[%s207 + $0x2c] sm:$0x3]
      %v271 = vld [vmem:[%s244 + $0x2c] sm:$0x3]
      %v272 = vld [vmem:[%s207 + $0x4] sm:$0xe]
      %v273 = vld [vmem:[%s207 + $0x2c] sm:$0xf]
      %v274 = vld [vmem:[%s207 + $0x30] sm:$0x3]
      %v275 = vld [vmem:[%s231 + $0x4] sm:$0xe]
      %v276 = vld [vmem:[%s231 + $0x2c] sm:$0xf]
      %v277 = vld [vmem:[%s231 + $0x30] sm:$0x3]
      %v278 = vld [vmem:[%s207 + $0x30] sm:$0x7]
      %v279 = vld [vmem:[%s212] sm:$0xf]
      %v280 = vld [vmem:[%s212 + $0x4] sm:$0xf]
      %v281 = vld [vmem:[%s212 + $0x8] sm:$0xf]
      %v282 = vld [vmem:[%s212 + $0xc] sm:$0xf]
      %v283 = vld [vmem:[%s212 + $0x10] sm:$0xf]
      %v284 = vld [vmem:[%s212 + $0x14] sm:$0xf]
      %v285 = vld [vmem:[%s212 + $0x18] sm:$0xf]
      %v286 = vld [vmem:[%s212 + $0x1c] sm:$0xf]
      %v287 = vld [vmem:[%s212 + $0x20] sm:$0xf]
      %v288 = vld [vmem:[%s212 + $0x24] sm:$0xf]
      %v289 = vld [vmem:[%s212 + $0x28] sm:$0xf]
      %v290 = vld [vmem:[%s212 + $0x2c] sm:$0x1]
      %v291 = vld [vmem:[%s212 + $0x2c] sm:$0x3]
      %v292 = vld [vmem:[%s212 + $0x4] sm:$0xe]
      %v293 = vld [vmem:[%s212 + $0x2c] sm:$0xf]
      %v294 = vld [vmem:[%s212 + $0x30] sm:$0x3]
      %v295 = vld [vmem:[%s212 + $0x30] sm:$0x7]
      %v308 = vunpack.c.l.b16 %v219
      %v309 = vunpack.c.l.b16 %v220
      %v310 = vunpack.c.l.b16 %v221
      %v311 = vunpack.c.l.b16 %v222
      %v312 = vunpack.c.l.b16 %v223
      %v313 = vunpack.c.l.b16 %v224
      %v314 = vunpack.c.l.b16 %v225
      %v315 = vunpack.c.l.b16 %v226
      %v316 = vunpack.c.l.b16 %v227
      %v317 = vunpack.c.l.b16 %v228
      %v318 = vunpack.c.l.b16 %v229
      %v319 = vunpack.c.l.b16 %v230
      %v320 = vpack.c.b16 %v309, %v308
      %v321 = vpack.c.b16 %v311, %v310
      %v322 = vpack.c.b16 %v313, %v312
      %v323 = vpack.c.b16 %v315, %v314
      %v324 = vpack.c.b16 %v317, %v316
      %v325 = vpack.c.b16 %v319, %v318
      %v338 = vunpack.c.l.b16 %v232
      %v339 = vunpack.c.l.b16 %v233
      %v340 = vunpack.c.l.b16 %v234
      %v341 = vunpack.c.l.b16 %v235
      %v342 = vunpack.c.l.b16 %v236
      %v343 = vunpack.c.l.b16 %v237
      %v344 = vunpack.c.l.b16 %v238
      %v345 = vunpack.c.l.b16 %v239
      %v346 = vunpack.c.l.b16 %v240
      %v347 = vunpack.c.l.b16 %v241
      %v348 = vunpack.c.l.b16 %v242
      %v349 = vunpack.c.l.b16 %v243
      %v350 = vpack.c.b16 %v339, %v338
      %v351 = vpack.c.b16 %v341, %v340
      %v352 = vpack.c.b16 %v343, %v342
      %v353 = vpack.c.b16 %v345, %v344
      %v354 = vpack.c.b16 %v347, %v346
      %v355 = vpack.c.b16 %v349, %v348
      %356 = vrot.lane.b32.xlu0 %v350, 4
      %v357 = vpop.permute.xlu0 %356
      %358 = vrot.lane.b32.xlu0 %v351, 4
      %v359 = vpop.permute.xlu0 %358
      %360 = vrot.lane.b32.xlu0 %v352, 4
      %v361 = vpop.permute.xlu0 %360
      %362 = vrot.lane.b32.xlu0 %v353, 4
      %v363 = vpop.permute.xlu0 %362
      %364 = vrot.lane.b32.xlu0 %v354, 4
      %v365 = vpop.permute.xlu0 %364
      %366 = vrot.lane.b32.xlu0 %v355, 4
      %v367 = vpop.permute.xlu0 %366
      %v380 = vunpack.c.l.b16 %v245
      %v381 = vunpack.c.l.b16 %v246
      %v382 = vunpack.c.l.b16 %v247
      %v383 = vunpack.c.l.b16 %v248
      %v384 = vunpack.c.l.b16 %v249
      %v385 = vunpack.c.l.b16 %v250
      %v386 = vunpack.c.l.b16 %v251
      %v387 = vunpack.c.l.b16 %v252
      %v388 = vunpack.c.l.b16 %v253
      %v389 = vunpack.c.l.b16 %v254
      %v390 = vunpack.c.l.b16 %v255
      %v391 = vunpack.c.l.b16 %v256
      %v392 = vpack.c.b16 %v381, %v380
      %v393 = vpack.c.b16 %v383, %v382
      %v394 = vpack.c.b16 %v385, %v384
      %v395 = vpack.c.b16 %v387, %v386
      %v396 = vpack.c.b16 %v389, %v388
      %v397 = vpack.c.b16 %v391, %v390
      %398 = vrot.lane.b32.xlu0 %v392, 8
      %v399 = vpop.permute.xlu0 %398
      %400 = vrot.lane.b32.xlu0 %v393, 8
      %v401 = vpop.permute.xlu0 %400
      %402 = vrot.lane.b32.xlu0 %v394, 8
      %v403 = vpop.permute.xlu0 %402
      %404 = vrot.lane.b32.xlu0 %v395, 8
      %v405 = vpop.permute.xlu0 %404
      %406 = vrot.lane.b32.xlu0 %v396, 8
      %v407 = vpop.permute.xlu0 %406
      %408 = vrot.lane.b32.xlu0 %v397, 8
      %v409 = vpop.permute.xlu0 %408
      %v422 = vunpack.c.l.b16 %v258
      %v423 = vunpack.c.l.b16 %v259
      %v424 = vunpack.c.l.b16 %v260
      %v425 = vunpack.c.l.b16 %v261
      %v426 = vunpack.c.l.b16 %v262
      %v427 = vunpack.c.l.b16 %v263
      %v428 = vunpack.c.l.b16 %v264
      %v429 = vunpack.c.l.b16 %v265
      %v430 = vunpack.c.l.b16 %v266
      %v431 = vunpack.c.l.b16 %v267
      %v432 = vunpack.c.l.b16 %v268
      %v433 = vunpack.c.l.b16 %v269
      %v434 = vpack.c.b16 %v423, %v422
      %v435 = vpack.c.b16 %v425, %v424
      %v436 = vpack.c.b16 %v427, %v426
      %v437 = vpack.c.b16 %v429, %v428
      %v438 = vpack.c.b16 %v431, %v430
      %v439 = vpack.c.b16 %v433, %v432
      %440 = vrot.lane.b32.xlu0 %v434, 12
      %v441 = vpop.permute.xlu0 %440
      %442 = vrot.lane.b32.xlu0 %v435, 12
      %v443 = vpop.permute.xlu0 %442
      %444 = vrot.lane.b32.xlu0 %v436, 12
      %v445 = vpop.permute.xlu0 %444
      %446 = vrot.lane.b32.xlu0 %v437, 12
      %v447 = vpop.permute.xlu0 %446
      %448 = vrot.lane.b32.xlu0 %v438, 12
      %v449 = vpop.permute.xlu0 %448
      %450 = vrot.lane.b32.xlu0 %v439, 12
      %v451 = vpop.permute.xlu0 %450
      %452 = vrot.lane.b32.xlu0 %v350, 16
      %v453 = vpop.permute.xlu0 %452
      %454 = vrot.lane.b32.xlu0 %v351, 16
      %v455 = vpop.permute.xlu0 %454
      %456 = vrot.lane.b32.xlu0 %v352, 16
      %v457 = vpop.permute.xlu0 %456
      %458 = vrot.lane.b32.xlu0 %v353, 16
      %v459 = vpop.permute.xlu0 %458
      %460 = vrot.lane.b32.xlu0 %v354, 16
      %v461 = vpop.permute.xlu0 %460
      %462 = vrot.lane.b32.xlu0 %v355, 16
      %v463 = vpop.permute.xlu0 %462
      %v465 = vunpack.c.l.b16 %v270
      %v466 = vpack.c.b16 %v465, %v318
      %vm467 = vsmask.f32 7424
      %v469 = vshrl.u32 %v320, 16
      %v471 = vshll.u32 %v320, 16
      %v473 = vrot.slane %v471, 1
      %v474 = vor.u32 %v469, %v473
      %v476 = vshll.u32 %v321, 16
      %v478 = vrot.slane %v476, 1
      %v479 = vsel %vm467, %v474, %v478
      %v480 = vshrl.u32 %v321, 16
      %v482 = vor.u32 %v480, %v478
      %v484 = vshll.u32 %v322, 16
      %v486 = vrot.slane %v484, 1
      %v487 = vsel %vm467, %v482, %v486
      %v488 = vshrl.u32 %v322, 16
      %v490 = vor.u32 %v488, %v486
      %v492 = vshll.u32 %v323, 16
      %v494 = vrot.slane %v492, 1
      %v495 = vsel %vm467, %v490, %v494
      %v496 = vshrl.u32 %v323, 16
      %v498 = vor.u32 %v496, %v494
      %v500 = vshll.u32 %v324, 16
      %v502 = vrot.slane %v500, 1
      %v503 = vsel %vm467, %v498, %v502
      %v504 = vshrl.u32 %v324, 16
      %v506 = vor.u32 %v504, %v502
      %v508 = vshll.u32 %v466, 16
      %v510 = vrot.slane %v508, 1
      %v511 = vsel %vm467, %v506, %v510
      %v512 = vshrl.u32 %v466, 16
      %v514 = vor.u32 %v512, %v510
      %515 = vrot.lane.b32.xlu0 %v479, 20
      %v516 = vpop.permute.xlu0 %515
      %517 = vrot.lane.b32.xlu0 %v487, 20
      %v518 = vpop.permute.xlu0 %517
      %519 = vrot.lane.b32.xlu0 %v495, 20
      %v520 = vpop.permute.xlu0 %519
      %521 = vrot.lane.b32.xlu0 %v503, 20
      %v522 = vpop.permute.xlu0 %521
      %523 = vrot.lane.b32.xlu0 %v511, 20
      %v524 = vpop.permute.xlu0 %523
      %525 = vrot.lane.b32.xlu0 %v514, 20
      %v526 = vpop.permute.xlu0 %525
      %527 = vrot.lane.b32.xlu0 %v434, 24
      %v528 = vpop.permute.xlu0 %527
      %529 = vrot.lane.b32.xlu0 %v435, 24
      %v530 = vpop.permute.xlu0 %529
      %531 = vrot.lane.b32.xlu0 %v436, 24
      %v532 = vpop.permute.xlu0 %531
      %533 = vrot.lane.b32.xlu0 %v437, 24
      %v534 = vpop.permute.xlu0 %533
      %535 = vrot.lane.b32.xlu0 %v438, 24
      %v536 = vpop.permute.xlu0 %535
      %537 = vrot.lane.b32.xlu0 %v439, 24
      %v538 = vpop.permute.xlu0 %537
      %v540 = vunpack.c.l.b16 %v271
      %v541 = vpack.c.b16 %v540, %v390
      %v543 = vshrl.u32 %v392, 16
      %v545 = vshll.u32 %v392, 16
      %v547 = vrot.slane %v545, 1
      %v548 = vor.u32 %v543, %v547
      %v550 = vshll.u32 %v393, 16
      %v552 = vrot.slane %v550, 1
      %v553 = vsel %vm467, %v548, %v552
      %v554 = vshrl.u32 %v393, 16
      %v556 = vor.u32 %v554, %v552
      %v558 = vshll.u32 %v394, 16
      %v560 = vrot.slane %v558, 1
      %v561 = vsel %vm467, %v556, %v560
      %v562 = vshrl.u32 %v394, 16
      %v564 = vor.u32 %v562, %v560
      %v566 = vshll.u32 %v395, 16
      %v568 = vrot.slane %v566, 1
      %v569 = vsel %vm467, %v564, %v568
      %v570 = vshrl.u32 %v395, 16
      %v572 = vor.u32 %v570, %v568
      %v574 = vshll.u32 %v396, 16
      %v576 = vrot.slane %v574, 1
      %v577 = vsel %vm467, %v572, %v576
      %v578 = vshrl.u32 %v396, 16
      %v580 = vor.u32 %v578, %v576
      %v582 = vshll.u32 %v541, 16
      %v584 = vrot.slane %v582, 1
      %v585 = vsel %vm467, %v580, %v584
      %v586 = vshrl.u32 %v541, 16
      %v588 = vor.u32 %v586, %v584
      %589 = vrot.lane.b32.xlu0 %v553, 28
      %v590 = vpop.permute.xlu0 %589
      %591 = vrot.lane.b32.xlu0 %v561, 28
      %v592 = vpop.permute.xlu0 %591
      %593 = vrot.lane.b32.xlu0 %v569, 28
      %v594 = vpop.permute.xlu0 %593
      %595 = vrot.lane.b32.xlu0 %v577, 28
      %v596 = vpop.permute.xlu0 %595
      %597 = vrot.lane.b32.xlu0 %v585, 28
      %v598 = vpop.permute.xlu0 %597
      %599 = vrot.lane.b32.xlu0 %v588, 28
      %v600 = vpop.permute.xlu0 %599
      %601 = vrot.lane.b32.xlu0 %v392, 32
      %v602 = vpop.permute.xlu0 %601
      %603 = vrot.lane.b32.xlu0 %v393, 32
      %v604 = vpop.permute.xlu0 %603
      %605 = vrot.lane.b32.xlu0 %v394, 32
      %v606 = vpop.permute.xlu0 %605
      %607 = vrot.lane.b32.xlu0 %v395, 32
      %v608 = vpop.permute.xlu0 %607
      %609 = vrot.lane.b32.xlu0 %v396, 32
      %v610 = vpop.permute.xlu0 %609
      %611 = vrot.lane.b32.xlu0 %v397, 32
      %v612 = vpop.permute.xlu0 %611
      %613 = vrot.lane.b32.xlu0 %v434, 36
      %v614 = vpop.permute.xlu0 %613
      %615 = vrot.lane.b32.xlu0 %v435, 36
      %v616 = vpop.permute.xlu0 %615
      %617 = vrot.lane.b32.xlu0 %v436, 36
      %v618 = vpop.permute.xlu0 %617
      %619 = vrot.lane.b32.xlu0 %v437, 36
      %v620 = vpop.permute.xlu0 %619
      %621 = vrot.lane.b32.xlu0 %v438, 36
      %v622 = vpop.permute.xlu0 %621
      %623 = vrot.lane.b32.xlu0 %v439, 36
      %v624 = vpop.permute.xlu0 %623
      %v628 = vunpack.c.l.b16 %v272
      %v629 = vunpack.c.l.b16 %v273
      %v630 = vunpack.c.l.b16 %v274
      %v631 = vpack.c.b16 %v310, %v628
      %v632 = vpack.c.b16 %v312, %v311
      %v633 = vpack.c.b16 %v314, %v313
      %v634 = vpack.c.b16 %v316, %v315
      %v635 = vpack.c.b16 %v318, %v317
      %v636 = vpack.c.b16 %v630, %v629
      %vm637 = vcmask 1046528
      %v638 = vrot.slane %v631, 1
      %v639 = vrot.slane %v632, 1
      %v640 = vsel %vm637, %v638, %v639
      %v641 = vrot.slane %v633, 1
      %v642 = vsel %vm637, %v639, %v641
      %v643 = vrot.slane %v634, 1
      %v644 = vsel %vm637, %v641, %v643
      %v645 = vrot.slane %v635, 1
      %v646 = vsel %vm637, %v643, %v645
      %v647 = vrot.slane %v636, 1
      %v648 = vsel %vm637, %v645, %v647
      %649 = vrot.lane.b32.xlu0 %v640, 40
      %v650 = vpop.permute.xlu0 %649
      %651 = vrot.lane.b32.xlu0 %v642, 40
      %v652 = vpop.permute.xlu0 %651
      %653 = vrot.lane.b32.xlu0 %v644, 40
      %v654 = vpop.permute.xlu0 %653
      %655 = vrot.lane.b32.xlu0 %v646, 40
      %v656 = vpop.permute.xlu0 %655
      %657 = vrot.lane.b32.xlu0 %v648, 40
      %v658 = vpop.permute.xlu0 %657
      %659 = vrot.lane.b32.xlu0 %v647, 40
      %v660 = vpop.permute.xlu0 %659
      %v664 = vunpack.c.l.b16 %v275
      %v665 = vunpack.c.l.b16 %v276
      %v666 = vunpack.c.l.b16 %v277
      %v667 = vpack.c.b16 %v340, %v664
      %v668 = vpack.c.b16 %v342, %v341
      %v669 = vpack.c.b16 %v344, %v343
      %v670 = vpack.c.b16 %v346, %v345
      %v671 = vpack.c.b16 %v348, %v347
      %v672 = vpack.c.b16 %v666, %v665
      %v673 = vrot.slane %v667, 1
      %v674 = vrot.slane %v668, 1
      %v675 = vsel %vm637, %v673, %v674
      %v676 = vrot.slane %v669, 1
      %v677 = vsel %vm637, %v674, %v676
      %v678 = vrot.slane %v670, 1
      %v679 = vsel %vm637, %v676, %v678
      %v680 = vrot.slane %v671, 1
      %v681 = vsel %vm637, %v678, %v680
      %v682 = vrot.slane %v672, 1
      %v683 = vsel %vm637, %v680, %v682
      %684 = vrot.lane.b32.xlu0 %v675, 44
      %v685 = vpop.permute.xlu0 %684
      %686 = vrot.lane.b32.xlu0 %v677, 44
      %v687 = vpop.permute.xlu0 %686
      %688 = vrot.lane.b32.xlu0 %v679, 44
      %v689 = vpop.permute.xlu0 %688
      %690 = vrot.lane.b32.xlu0 %v681, 44
      %v691 = vpop.permute.xlu0 %690
      %692 = vrot.lane.b32.xlu0 %v683, 44
      %v693 = vpop.permute.xlu0 %692
      %694 = vrot.lane.b32.xlu0 %v682, 44
      %v695 = vpop.permute.xlu0 %694
      %696 = vrot.lane.b32.xlu0 %v434, 48
      %v697 = vpop.permute.xlu0 %696
      %698 = vrot.lane.b32.xlu0 %v435, 48
      %v699 = vpop.permute.xlu0 %698
      %700 = vrot.lane.b32.xlu0 %v436, 48
      %v701 = vpop.permute.xlu0 %700
      %702 = vrot.lane.b32.xlu0 %v437, 48
      %v703 = vpop.permute.xlu0 %702
      %704 = vrot.lane.b32.xlu0 %v438, 48
      %v705 = vpop.permute.xlu0 %704
      %706 = vrot.lane.b32.xlu0 %v439, 48
      %v707 = vpop.permute.xlu0 %706
      %708 = vrot.lane.b32.xlu0 %v553, 52
      %v709 = vpop.permute.xlu0 %708
      %710 = vrot.lane.b32.xlu0 %v561, 52
      %v711 = vpop.permute.xlu0 %710
      %712 = vrot.lane.b32.xlu0 %v569, 52
      %v713 = vpop.permute.xlu0 %712
      %714 = vrot.lane.b32.xlu0 %v577, 52
      %v715 = vpop.permute.xlu0 %714
      %716 = vrot.lane.b32.xlu0 %v585, 52
      %v717 = vpop.permute.xlu0 %716
      %718 = vrot.lane.b32.xlu0 %v588, 52
      %v719 = vpop.permute.xlu0 %718
      %720 = vrot.lane.b32.xlu0 %v675, 56
      %v721 = vpop.permute.xlu0 %720
      %722 = vrot.lane.b32.xlu0 %v677, 56
      %v723 = vpop.permute.xlu0 %722
      %724 = vrot.lane.b32.xlu0 %v679, 56
      %v725 = vpop.permute.xlu0 %724
      %726 = vrot.lane.b32.xlu0 %v681, 56
      %v727 = vpop.permute.xlu0 %726
      %728 = vrot.lane.b32.xlu0 %v683, 56
      %v729 = vpop.permute.xlu0 %728
      %730 = vrot.lane.b32.xlu0 %v682, 56
      %v731 = vpop.permute.xlu0 %730
      %v733 = vunpack.c.l.b16 %v278
      %v734 = vpack.c.b16 %v733, %v629
      %vm735 = vsmask.f32 6400
      %v737 = vshrl.u32 %v631, 16
      %v739 = vrot.slane %v737, 1
      %v740 = vshll.u32 %v631, 16
      %v742 = vrot.slane %v740, 2
      %v743 = vor.u32 %v739, %v742
      %v745 = vshrl.u32 %v632, 16
      %v747 = vrot.slane %v745, 1
      %v748 = vshll.u32 %v632, 16
      %v750 = vrot.slane %v748, 2
      %v751 = vor.u32 %v747, %v750
      %v752 = vsel %vm735, %v743, %v751
      %v754 = vshrl.u32 %v633, 16
      %v756 = vrot.slane %v754, 1
      %v757 = vshll.u32 %v633, 16
      %v759 = vrot.slane %v757, 2
      %v760 = vor.u32 %v756, %v759
      %v761 = vsel %vm735, %v751, %v760
      %v763 = vshrl.u32 %v634, 16
      %v765 = vrot.slane %v763, 1
      %v766 = vshll.u32 %v634, 16
      %v768 = vrot.slane %v766, 2
      %v769 = vor.u32 %v765, %v768
      %v770 = vsel %vm735, %v760, %v769
      %v772 = vshrl.u32 %v635, 16
      %v774 = vrot.slane %v772, 1
      %v775 = vshll.u32 %v635, 16
      %v777 = vrot.slane %v775, 2
      %v778 = vor.u32 %v774, %v777
      %v779 = vsel %vm735, %v769, %v778
      %v781 = vshrl.u32 %v734, 16
      %v783 = vrot.slane %v781, 1
      %v784 = vshll.u32 %v734, 16
      %v786 = vrot.slane %v784, 2
      %v787 = vor.u32 %v783, %v786
      %v788 = vsel %vm735, %v778, %v787
      %789 = vrot.lane.b32.xlu0 %v752, 60
      %v790 = vpop.permute.xlu0 %789
      %791 = vrot.lane.b32.xlu0 %v761, 60
      %v792 = vpop.permute.xlu0 %791
      %793 = vrot.lane.b32.xlu0 %v770, 60
      %v794 = vpop.permute.xlu0 %793
      %795 = vrot.lane.b32.xlu0 %v779, 60
      %v796 = vpop.permute.xlu0 %795
      %797 = vrot.lane.b32.xlu0 %v788, 60
      %v798 = vpop.permute.xlu0 %797
      %799 = vrot.lane.b32.xlu0 %v787, 60
      %v800 = vpop.permute.xlu0 %799
      %vm801 = vcmask 31744
      %v803 = vsel %vm801, %v320, %v357
      %v805 = vsel %vm801, %v321, %v359
      %v807 = vsel %vm801, %v322, %v361
      %v809 = vsel %vm801, %v323, %v363
      %v811 = vsel %vm801, %v324, %v365
      %v814 = vsel %vm801, %v325, %v367
      %vm815 = vcmask 64512
      %v817 = vsel %vm815, %v803, %v399
      %v819 = vsel %vm815, %v805, %v401
      %v821 = vsel %vm815, %v807, %v403
      %v823 = vsel %vm815, %v809, %v405
      %v825 = vsel %vm815, %v811, %v407
      %v827 = vsel %vm815, %v814, %v409
      %vm828 = vcmask 97280
      %v830 = vsel %vm828, %v817, %v441
      %v832 = vsel %vm828, %v819, %v443
      %v834 = vsel %vm828, %v821, %v445
      %v836 = vsel %vm828, %v823, %v447
      %v838 = vsel %vm828, %v825, %v449
      %v840 = vsel %vm828, %v827, %v451
      %vm841 = vcmask 130048
      %v843 = vsel %vm841, %v830, %v453
      %v845 = vsel %vm841, %v832, %v455
      %v847 = vsel %vm841, %v834, %v457
      %v849 = vsel %vm841, %v836, %v459
      %v851 = vsel %vm841, %v838, %v461
      %v853 = vsel %vm841, %v840, %v463
      %vm854 = vcmask 162816
      %v856 = vsel %vm854, %v843, %v516
      %v858 = vsel %vm854, %v845, %v518
      %v860 = vsel %vm854, %v847, %v520
      %v862 = vsel %vm854, %v849, %v522
      %v864 = vsel %vm854, %v851, %v524
      %v866 = vsel %vm854, %v853, %v526
      %vm867 = vcmask 195584
      %v869 = vsel %vm867, %v856, %v528
      %v871 = vsel %vm867, %v858, %v530
      %v873 = vsel %vm867, %v860, %v532
      %v875 = vsel %vm867, %v862, %v534
      %v877 = vsel %vm867, %v864, %v536
      %v879 = vsel %vm867, %v866, %v538
      %vm880 = vcmask 228352
      %v882 = vsel %vm880, %v869, %v590
      %v884 = vsel %vm880, %v871, %v592
      %v886 = vsel %vm880, %v873, %v594
      %v888 = vsel %vm880, %v875, %v596
      %v890 = vsel %vm880, %v877, %v598
      %v892 = vsel %vm880, %v879, %v600
      %vm893 = vcmask 261120
      %v895 = vsel %vm893, %v882, %v602
      %v897 = vsel %vm893, %v884, %v604
      %v899 = vsel %vm893, %v886, %v606
      %v901 = vsel %vm893, %v888, %v608
      %v903 = vsel %vm893, %v890, %v610
      %v905 = vsel %vm893, %v892, %v612
      %vm906 = vcmask 293888
      %v908 = vsel %vm906, %v895, %v614
      %v910 = vsel %vm906, %v897, %v616
      %v912 = vsel %vm906, %v899, %v618
      %v914 = vsel %vm906, %v901, %v620
      %v916 = vsel %vm906, %v903, %v622
      %v918 = vsel %vm906, %v905, %v624
      %vm919 = vcmask 326656
      %v921 = vsel %vm919, %v908, %v650
      %v923 = vsel %vm919, %v910, %v652
      %v925 = vsel %vm919, %v912, %v654
      %v927 = vsel %vm919, %v914, %v656
      %v929 = vsel %vm919, %v916, %v658
      %v931 = vsel %vm919, %v918, %v660
      %vm932 = vcmask 359424
      %v934 = vsel %vm932, %v921, %v685
      %v936 = vsel %vm932, %v923, %v687
      %v938 = vsel %vm932, %v925, %v689
      %v940 = vsel %vm932, %v927, %v691
      %v942 = vsel %vm932, %v929, %v693
      %v944 = vsel %vm932, %v931, %v695
      %vm945 = vcmask 392192
      %v947 = vsel %vm945, %v934, %v697
      %v949 = vsel %vm945, %v936, %v699
      %v951 = vsel %vm945, %v938, %v701
      %v953 = vsel %vm945, %v940, %v703
      %v955 = vsel %vm945, %v942, %v705
      %v957 = vsel %vm945, %v944, %v707
      %vm958 = vcmask 424960
      %v960 = vsel %vm958, %v947, %v709
      %v962 = vsel %vm958, %v949, %v711
      %v964 = vsel %vm958, %v951, %v713
      %v966 = vsel %vm958, %v953, %v715
      %v968 = vsel %vm958, %v955, %v717
      %v970 = vsel %vm958, %v957, %v719
      %vm971 = vcmask 457728
      %v973 = vsel %vm971, %v960, %v721
      %v975 = vsel %vm971, %v962, %v723
      %v977 = vsel %vm971, %v964, %v725
      %v979 = vsel %vm971, %v966, %v727
      %v981 = vsel %vm971, %v968, %v729
      %v983 = vsel %vm971, %v970, %v731
      %vm984 = vcmask 490496
      %v986 = vsel %vm984, %v973, %v790
      %v988 = vsel %vm984, %v975, %v792
      %v990 = vsel %vm984, %v977, %v794
      %v992 = vsel %vm984, %v979, %v796
      %v994 = vsel %vm984, %v981, %v798
      %v996 = vsel %vm984, %v983, %v800
      %v1009 = vunpack.c.l.b16 %v279
      %v1010 = vunpack.c.l.b16 %v280
      %v1011 = vunpack.c.l.b16 %v281
      %v1012 = vunpack.c.l.b16 %v282
      %v1013 = vunpack.c.l.b16 %v283
      %v1014 = vunpack.c.l.b16 %v284
      %v1015 = vunpack.c.l.b16 %v285
      %v1016 = vunpack.c.l.b16 %v286
      %v1017 = vunpack.c.l.b16 %v287
      %v1018 = vunpack.c.l.b16 %v288
      %v1019 = vunpack.c.l.b16 %v289
      %v1020 = vunpack.c.l.b16 %v290
      %v1021 = vpack.c.b16 %v1010, %v1009
      %v1022 = vpack.c.b16 %v1012, %v1011
      %v1023 = vpack.c.b16 %v1014, %v1013
      %v1024 = vpack.c.b16 %v1016, %v1015
      %v1025 = vpack.c.b16 %v1018, %v1017
      %v1026 = vpack.c.b16 %v1020, %v1019
      %v1028 = vunpack.c.l.b16 %v291
      %v1029 = vpack.c.b16 %v1028, %v1019
      %v1031 = vshrl.u32 %v1021, 16
      %v1033 = vshll.u32 %v1021, 16
      %v1035 = vrot.slane %v1033, 1
      %v1036 = vor.u32 %v1031, %v1035
      %v1038 = vshll.u32 %v1022, 16
      %v1040 = vrot.slane %v1038, 1
      %v1041 = vsel %vm467, %v1036, %v1040
      %v1042 = vshrl.u32 %v1022, 16
      %v1044 = vor.u32 %v1042, %v1040
      %v1046 = vshll.u32 %v1023, 16
      %v1048 = vrot.slane %v1046, 1
      %v1049 = vsel %vm467, %v1044, %v1048
      %v1050 = vshrl.u32 %v1023, 16
      %v1052 = vor.u32 %v1050, %v1048
      %v1054 = vshll.u32 %v1024, 16
      %v1056 = vrot.slane %v1054, 1
      %v1057 = vsel %vm467, %v1052, %v1056
      %v1058 = vshrl.u32 %v1024, 16
      %v1060 = vor.u32 %v1058, %v1056
      %v1062 = vshll.u32 %v1025, 16
      %v1064 = vrot.slane %v1062, 1
      %v1065 = vsel %vm467, %v1060, %v1064
      %v1066 = vshrl.u32 %v1025, 16
      %v1068 = vor.u32 %v1066, %v1064
      %v1070 = vshll.u32 %v1029, 16
      %v1072 = vrot.slane %v1070, 1
      %v1073 = vsel %vm467, %v1068, %v1072
      %v1074 = vshrl.u32 %v1029, 16
      %v1076 = vor.u32 %v1074, %v1072
      %1077 = vrot.lane.b32.xlu0 %v1041, 8
      %v1078 = vpop.permute.xlu0 %1077
      %1079 = vrot.lane.b32.xlu0 %v1049, 8
      %v1080 = vpop.permute.xlu0 %1079
      %1081 = vrot.lane.b32.xlu0 %v1057, 8
      %v1082 = vpop.permute.xlu0 %1081
      %1083 = vrot.lane.b32.xlu0 %v1065, 8
      %v1084 = vpop.permute.xlu0 %1083
      %1085 = vrot.lane.b32.xlu0 %v1073, 8
      %v1086 = vpop.permute.xlu0 %1085
      %1087 = vrot.lane.b32.xlu0 %v1076, 8
      %v1088 = vpop.permute.xlu0 %1087
      %v1092 = vunpack.c.l.b16 %v292
      %v1093 = vunpack.c.l.b16 %v293
      %v1094 = vunpack.c.l.b16 %v294
      %v1095 = vpack.c.b16 %v1011, %v1092
      %v1096 = vpack.c.b16 %v1013, %v1012
      %v1097 = vpack.c.b16 %v1015, %v1014
      %v1098 = vpack.c.b16 %v1017, %v1016
      %v1099 = vpack.c.b16 %v1019, %v1018
      %v1100 = vpack.c.b16 %v1094, %v1093
      %v1101 = vrot.slane %v1095, 1
      %v1102 = vrot.slane %v1096, 1
      %v1103 = vsel %vm637, %v1101, %v1102
      %v1104 = vrot.slane %v1097, 1
      %v1105 = vsel %vm637, %v1102, %v1104
      %v1106 = vrot.slane %v1098, 1
      %v1107 = vsel %vm637, %v1104, %v1106
      %v1108 = vrot.slane %v1099, 1
      %v1109 = vsel %vm637, %v1106, %v1108
      %v1110 = vrot.slane %v1100, 1
      %v1111 = vsel %vm637, %v1108, %v1110
      %1112 = vrot.lane.b32.xlu0 %v1103, 16
      %v1113 = vpop.permute.xlu0 %1112
      %1114 = vrot.lane.b32.xlu0 %v1105, 16
      %v1115 = vpop.permute.xlu0 %1114
      %1116 = vrot.lane.b32.xlu0 %v1107, 16
      %v1117 = vpop.permute.xlu0 %1116
      %1118 = vrot.lane.b32.xlu0 %v1109, 16
      %v1119 = vpop.permute.xlu0 %1118
      %1120 = vrot.lane.b32.xlu0 %v1111, 16
      %v1121 = vpop.permute.xlu0 %1120
      %1122 = vrot.lane.b32.xlu0 %v1110, 16
      %v1123 = vpop.permute.xlu0 %1122
      %v1125 = vunpack.c.l.b16 %v295
      %v1126 = vpack.c.b16 %v1125, %v1093
      %v1128 = vshrl.u32 %v1095, 16
      %v1130 = vrot.slane %v1128, 1
      %v1131 = vshll.u32 %v1095, 16
      %v1133 = vrot.slane %v1131, 2
      %v1134 = vor.u32 %v1130, %v1133
      %v1136 = vshrl.u32 %v1096, 16
      %v1138 = vrot.slane %v1136, 1
      %v1139 = vshll.u32 %v1096, 16
      %v1141 = vrot.slane %v1139, 2
      %v1142 = vor.u32 %v1138, %v1141
      %v1143 = vsel %vm735, %v1134, %v1142
      %v1145 = vshrl.u32 %v1097, 16
      %v1147 = vrot.slane %v1145, 1
      %v1148 = vshll.u32 %v1097, 16
      %v1150 = vrot.slane %v1148, 2
      %v1151 = vor.u32 %v1147, %v1150
      %v1152 = vsel %vm735, %v1142, %v1151
      %v1154 = vshrl.u32 %v1098, 16
      %v1156 = vrot.slane %v1154, 1
      %v1157 = vshll.u32 %v1098, 16
      %v1159 = vrot.slane %v1157, 2
      %v1160 = vor.u32 %v1156, %v1159
      %v1161 = vsel %vm735, %v1151, %v1160
      %v1163 = vshrl.u32 %v1099, 16
      %v1165 = vrot.slane %v1163, 1
      %v1166 = vshll.u32 %v1099, 16
      %v1168 = vrot.slane %v1166, 2
      %v1169 = vor.u32 %v1165, %v1168
      %v1170 = vsel %vm735, %v1160, %v1169
      %v1172 = vshrl.u32 %v1126, 16
      %v1174 = vrot.slane %v1172, 1
      %v1175 = vshll.u32 %v1126, 16
      %v1177 = vrot.slane %v1175, 2
      %v1178 = vor.u32 %v1174, %v1177
      %v1179 = vsel %vm735, %v1169, %v1178
      %1180 = vrot.lane.b32.xlu0 %v1143, 24
      %v1181 = vpop.permute.xlu0 %1180
      %1182 = vrot.lane.b32.xlu0 %v1152, 24
      %v1183 = vpop.permute.xlu0 %1182
      %1184 = vrot.lane.b32.xlu0 %v1161, 24
      %v1185 = vpop.permute.xlu0 %1184
      %1186 = vrot.lane.b32.xlu0 %v1170, 24
      %v1187 = vpop.permute.xlu0 %1186
      %1188 = vrot.lane.b32.xlu0 %v1179, 24
      %v1189 = vpop.permute.xlu0 %1188
      %1190 = vrot.lane.b32.xlu0 %v1178, 24
      %v1191 = vpop.permute.xlu0 %1190
      %v1193 = vsel %vm815, %v1021, %v1078
      %v1195 = vsel %vm815, %v1022, %v1080
      %v1197 = vsel %vm815, %v1023, %v1082
      %v1199 = vsel %vm815, %v1024, %v1084
      %v1201 = vsel %vm815, %v1025, %v1086
      %v1204 = vsel %vm815, %v1026, %v1088
      %v1206 = vsel %vm841, %v1193, %v1113
      %v1208 = vsel %vm841, %v1195, %v1115
      %v1210 = vsel %vm841, %v1197, %v1117
      %v1212 = vsel %vm841, %v1199, %v1119
      %v1214 = vsel %vm841, %v1201, %v1121
      %v1216 = vsel %vm841, %v1204, %v1123
      %v1218 = vsel %vm867, %v1206, %v1181
      %v1220 = vsel %vm867, %v1208, %v1183
      %v1222 = vsel %vm867, %v1210, %v1185
      %v1224 = vsel %vm867, %v1212, %v1187
      %v1226 = vsel %vm867, %v1214, %v1189
      %v1228 = vsel %vm867, %v1216, %v1191
      %1235 = vrot.lane.b32.xlu0 %v1218, 64
      %v1236 = vpop.permute.xlu0 %1235
      %1237 = vrot.lane.b32.xlu0 %v1220, 64
      %v1238 = vpop.permute.xlu0 %1237
      %1239 = vrot.lane.b32.xlu0 %v1222, 64
      %v1240 = vpop.permute.xlu0 %1239
      %1241 = vrot.lane.b32.xlu0 %v1224, 64
      %v1242 = vpop.permute.xlu0 %1241
      %1243 = vrot.lane.b32.xlu0 %v1226, 64
      %v1244 = vpop.permute.xlu0 %1243
      %1245 = vrot.lane.b32.xlu0 %v1228, 64
      %v1246 = vpop.permute.xlu0 %1245
      %vm1247 = vcmask 523264
      %v1249 = vsel %vm1247, %v986, %v1236
      %v1251 = vsel %vm1247, %v988, %v1238
      %v1253 = vsel %vm1247, %v990, %v1240
      %v1255 = vsel %vm1247, %v992, %v1242
      %v1257 = vsel %vm1247, %v994, %v1244
      %v1259 = vsel %vm1247, %v996, %v1246
      %v1260 = vld [vmem:[%s2] sm:$0xf]
      %v1261 = vld [vmem:[%s2 + $0x4] sm:$0xf]
      %v1262 = vld [vmem:[%s2 + $0x8] sm:$0xf]
      %v1263 = vld [vmem:[%s2 + $0xc] sm:$0xf]
      %v1264 = vld [vmem:[%s2 + $0x10] sm:$0xf]
      %v1265 = vld [vmem:[%s2 + $0x14] sm:$0xf]
      %v1266 = vld [vmem:[%s2 + $0x18] sm:$0xf]
      %v1267 = vld [vmem:[%s2 + $0x1c] sm:$0xf]
      %v1268 = vld [vmem:[%s2 + $0x20] sm:$0xf]
      %v1269 = vld [vmem:[%s2 + $0x24] sm:$0xf]
      %v1270 = vld [vmem:[%s2 + $0x28] sm:$0xf]
      %v1271 = vld [vmem:[%s2 + $0x2c] sm:$0xf]
      %v1272 = vld [vmem:[%s3] sm:$0x1]
      %v1274 = vlaneseq
      %v1275 = vshrl.u32 %v1274, 7
      %v1276 = vsub.s32 0, %v1275
      %v1277 = vrot.slane %v1272, %v1276
      %v1291 = vunpack.c.l.b16 %v1260
      %v1292 = vunpack.c.l.b16 %v1261
      %v1293 = vunpack.c.l.b16 %v1262
      %v1294 = vunpack.c.l.b16 %v1263
      %v1295 = vunpack.c.l.b16 %v1264
      %v1296 = vunpack.c.l.b16 %v1265
      %v1297 = vunpack.c.l.b16 %v1266
      %v1298 = vunpack.c.l.b16 %v1267
      %v1299 = vunpack.c.l.b16 %v1268
      %v1300 = vunpack.c.l.b16 %v1269
      %v1301 = vunpack.c.l.b16 %v1270
      %v1302 = vunpack.c.l.b16 %v1271
      %v1303 = vpack.c.b16 %v1292, %v1291
      %v1304 = vpack.c.b16 %v1294, %v1293
      %v1305 = vpack.c.b16 %v1296, %v1295
      %v1306 = vpack.c.b16 %v1298, %v1297
      %v1307 = vpack.c.b16 %v1300, %v1299
      %v1308 = vpack.c.b16 %v1302, %v1301
      %vm1315 = vcmask 785408
      %v1316 = vsel %vm1315, %v1249, 0
      %v1318 = vsel %vm1315, %v1251, 0
      %v1320 = vsel %vm1315, %v1253, 0
      %v1322 = vsel %vm1315, %v1255, 0
      %v1324 = vsel %vm1315, %v1257, 0
      %v1326 = vsel %vm1315, %v1259, 0
      %1328 = vmatprep.subr.bf16.mxu0 0
      %1329 = vmatpush1.bf16.msra.mxu0 0
      %1330 = vmatprep.subr.bf16.mxu0 0
      %1331 = vmatpush1.bf16.msra.mxu0 0
      %1332 = vmatprep.subr.bf16.mxu0 0
      %1333 = vmatpush1.bf16.msra.mxu0 %v1308
      %1334 = vmatprep.subr.bf16.mxu0 0
      %1335 = vmatpush1.bf16.msra.mxu0 %v1307
      %1336 = vmatprep.subr.bf16.mxu0 0
      %1337 = vmatpush1.bf16.msra.mxu0 %v1306
      %1338 = vmatprep.subr.bf16.mxu0 0
      %1339 = vmatpush1.bf16.msra.mxu0 %v1305
      %1340 = vmatprep.subr.bf16.mxu0 0
      %1341 = vmatpush1.bf16.msra.mxu0 %v1304
      %1342 = vmatprep.subr.bf16.mxu0 0
      %1343 = vmatpush1.bf16.msra.mxu0 %v1303
      %1344 = vmatprep.subr.bf16.mxu0 0
      %1345 = vmatpush2.bf16.msra.mxu0 0
      %1346 = vmatprep.subr.bf16.mxu0 0
      %1347 = vmatpush2.bf16.msra.mxu0 0
      %1348 = vmatprep.subr.bf16.mxu0 0
      %1349 = vmatpush2.bf16.msra.mxu0 0
      %1350 = vmatprep.subr.bf16.mxu0 0
      %1351 = vmatpush2.bf16.msra.mxu0 0
      %1352 = vmatprep.subr.bf16.mxu0 0
      %1353 = vmatpush2.bf16.msra.mxu0 0
      %1354 = vmatprep.subr.bf16.mxu0 0
      %1355 = vmatpush2.bf16.msra.mxu0 0
      %1356 = vmatprep.subr.bf16.mxu0 0
      %1357 = vmatpush2.bf16.msra.mxu0 0
      %1358 = vmatprep.subr.bf16.mxu0 0
      %1359 = vmatpush2.bf16.msra.mxu0 0
      %1360 = vmatprep.mubr.bf16.mxu0 0
      %1361 = vmatmul.mubr.bf16.gmra.mxu0 %v1316
      %v1362 = vpop.f32.mrf.mxu0
      %v1363 = vadd.f32 %v1277, %v1362
      %v1364 = vpop.f32.mrf.mxu0
      %v1365 = vpop.f32.mrf.mxu0
      %v1366 = vadd.f32 %v1277, %v1365
      %v1367 = vpop.f32.mrf.mxu0
      %1368 = vmatprep.mubr.bf16.mxu0 0
      %1369 = vmatmul.mubr.bf16.gmra.mxu0 %v1318
      %v1370 = vpop.f32.mrf.mxu0
      %v1371 = vadd.f32 %v1277, %v1370
      %v1372 = vpop.f32.mrf.mxu0
      %v1373 = vpop.f32.mrf.mxu0
      %v1374 = vadd.f32 %v1277, %v1373
      %v1375 = vpop.f32.mrf.mxu0
      %1376 = vmatprep.mubr.bf16.mxu0 0
      %1377 = vmatmul.mubr.bf16.gmra.mxu0 %v1320
      %v1378 = vpop.f32.mrf.mxu0
      %v1379 = vadd.f32 %v1277, %v1378
      %v1380 = vpop.f32.mrf.mxu0
      %v1381 = vpop.f32.mrf.mxu0
      %v1382 = vadd.f32 %v1277, %v1381
      %v1383 = vpop.f32.mrf.mxu0
      %1384 = vmatprep.mubr.bf16.mxu0 0
      %1385 = vmatmul.mubr.bf16.gmra.mxu0 %v1322
      %v1386 = vpop.f32.mrf.mxu0
      %v1387 = vadd.f32 %v1277, %v1386
      %v1388 = vpop.f32.mrf.mxu0
      %v1389 = vpop.f32.mrf.mxu0
      %v1390 = vadd.f32 %v1277, %v1389
      %v1391 = vpop.f32.mrf.mxu0
      %1392 = vmatprep.mubr.bf16.mxu0 0
      %1393 = vmatmul.mubr.bf16.gmra.mxu0 %v1324
      %v1394 = vpop.f32.mrf.mxu0
      %v1395 = vadd.f32 %v1277, %v1394
      %v1396 = vpop.f32.mrf.mxu0
      %v1397 = vpop.f32.mrf.mxu0
      %v1398 = vadd.f32 %v1277, %v1397
      %v1399 = vpop.f32.mrf.mxu0
      %1400 = vmatprep.mubr.bf16.mxu0 0
      %1401 = vmatmul.mubr.bf16.gmra.mxu0 %v1326
      %v1402 = vpop.f32.mrf.mxu0
      %v1403 = vadd.f32 %v1277, %v1402
      %v1404 = vpop.f32.mrf.mxu0
      %v1405 = vpop.f32.mrf.mxu0
      %v1406 = vadd.f32 %v1277, %v1405
      %v1407 = vpop.f32.mrf.mxu0
      %1408 = vdwg.mxu0
      %1409 = vst [vmem:[%s217] sm:$0xff] %v1363
      %1410 = vst [vmem:[%s217 + $0x8] sm:$0xff] %v1366
      %1411 = vst [vmem:[%s217 + $0x10] sm:$0xff] %v1371
      %1412 = vst [vmem:[%s217 + $0x18] sm:$0xff] %v1374
      %1413 = vst [vmem:[%s217 + $0x20] sm:$0xff] %v1379
      %1414 = vst [vmem:[%s217 + $0x28] sm:$0xff] %v1382
      %1415 = vst [vmem:[%s217 + $0x30] sm:$0xff] %v1387
      %1416 = vst [vmem:[%s217 + $0x38] sm:$0xff] %v1390
      %1417 = vst [vmem:[%s217 + $0x40] sm:$0xff] %v1395
      %1418 = vst [vmem:[%s217 + $0x48] sm:$0xff] %v1398
      %1419 = vst [vmem:[%s217 + $0x50] sm:$0xff] %v1403
      %1420 = vst [vmem:[%s217 + $0x58] sm:$0x3] %v1406
      %p1421 = scmp.lt.s32.totalorder %s15, 1
      %s1422 = scalar_select %p1421, %s15, 1
      %s1423 = smul.addr %s1422, 12
      %s1424 = smul.addr %s1423, 8
      %s1425 = scalar_lea.vmem %s4, %s1424
      // Predicated region
      $region37: #{octconv_forward.1} parent=35 // pred_check
        %p1426 = pneg %p127
      $region38: #{octconv_forward.1} parent=35 // pred_check_branch
        %1428 = sbr.rel (%p1426) target = $region40
      $region39: #{octconv_forward.1} parent=35 // pred_region
        _
      $region40: #{octconv_forward.1} parent=35 // pred_fallthru
        _
    $region36: #{octconv_forward.1} parent=5 // pred_fallthru
      _
    %p1429 = scmp.le.s32.totalorder 2, %s10
    // Predicated region
    $region41: #{octconv_forward.1} parent=5 // pred_check
      %p1430 = pneg %p1429
    $region42: #{octconv_forward.1} parent=5 // pred_check_branch
      %1432 = sbr.rel (%p1430) target = $region44
    $region43: #{octconv_forward.1} parent=5 // pred_region
      %s1433 = ssub.s32 %s10, 2
      // Predicated region
      $region45: #{octconv_forward.1} parent=43 // pred_check
        %p1434 = pneg %p133
      $region46: #{octconv_forward.1} parent=43 // pred_check_branch
        %1436 = sbr.rel (%p1434) target = $region48
      $region47: #{octconv_forward.1} parent=43 // pred_region
        %p1437 = scmp.lt.s32.totalorder %s16, 1
        %s1438 = scalar_select %p1437, %s16, 1
        %s1439 = smul.addr %s1438, 12
        %s1440 = smul.addr %s1439, 8
        %s1441 = scalar_lea.vmem %s4, %s1440
      $region48: #{octconv_forward.1} parent=43 // pred_fallthru
        _
    $region44: #{octconv_forward.1} parent=5 // pred_fallthru
      _
  $region6: #{octconv_forward.1} parent=0 // loop_footer
    %s14 = sadd.s32 1, %s10
  $region7: #{octconv_forward.1} parent=0 // loop_footer_branch
    %9 = sbr.rel target = $region3
  $region8: #{octconv_forward.1} parent=0 // loop_exit
    _

</llo_original>
